<compile_context>
chip_gen: v7x
topology: tpu7x:2x2x1
jax: 0.10.0
libtpu: 0.0.40
codegen_flags: <defaults>
</compile_context>

<pallas_src>
import functools

import jax
import jax.numpy as jnp
from jax import lax
from jax.experimental import pallas as pl
from jax.experimental.pallas import tpu as pltpu

EPS = 1e-5          # nn.BatchNorm2d default eps
NEG_SLOPE = 0.2     # F.leaky_relu slope
LANE = 128


def _round_up(a, b):
    return (a + b - 1) // b * b


def _vmem_budget_bytes():
    """Generation-aware VMEM budget: v7x has 64 MiB/TC, v5e/v6e have 128 MiB."""
    cap = 64 * 1024 * 1024                       # conservative fallback (v7x physical)
    try:
        cap = int(pltpu.get_tpu_info().vmem_capacity_bytes)
    except Exception:
        pass
    if cap <= 64 * 1024 * 1024:
        return 40 * 1024 * 1024                  # v7x: leave double-buffering headroom
    return 96 * 1024 * 1024                      # v5e / v6e: use the big VMEM


def _pick_tile_k(k_dim):
    """Lane-padded K and a K-tile that divides it (bounds VMEM for large C_in)."""
    k_pad = _round_up(k_dim, LANE)
    if k_pad <= 2560:                            # small K: keep the whole slab resident
        return k_pad, k_pad
    q = k_pad // LANE
    d = 1
    for cand in range(2, 9):                     # tile_k <= 1024, prefer larger
        if q % cand == 0:
            d = cand
    return k_pad, LANE * d


def _pick_tile_m(budget, tile_k, c_pad, conv_bytes, m_rows):
    """Largest M tile (mult of 8) whose double-buffered blocks fit the VMEM budget."""
    fixed = 4 * tile_k * c_pad + (4 << 20)       # resident bf16 weight bufs + slack
    per_row = 4 * tile_k + (2 * conv_bytes + 4) * c_pad
    cap = (budget - fixed) // per_row
    cap = max(64, min(2048, cap)) // 8 * 8
    if m_rows <= cap:
        return _round_up(m_rows, 8)
    for t in range(cap, 63, -8):                 # prefer a divisor of M: no padded copy
        if m_rows % t == 0:
            return t
    return cap


def _pick_tile_hw(budget, hw, c_pad, c_out, conv_bytes):
    """Per-image spatial tile for phase 2 (must be 8-aligned; 128-mult or full for the store)."""
    per_row = 2 * conv_bytes * c_pad + 8 * c_out + 4 * c_pad
    cap = (budget - (4 << 20)) // per_row
    cap = max(8, min(1024, cap)) // 8 * 8
    if hw <= cap and hw % 8 == 0:
        return hw
    t = cap // LANE * LANE
    while t >= LANE:
        if hw % t == 0:
            return t
        t -= LANE
    return None                                  # caller falls back to (M, C) layout


# ---------------- phase 1: K-tiled conv matmul + per-tile partial statistics ----------------
def _conv_stats_kernel(p_ref, w_ref, conv_ref, psum_ref, psq_ref, acc_ref):
    k = pl.program_id(1)

    @pl.when(k == 0)
    def _init():
        acc_ref[...] = jnp.zeros_like(acc_ref)

    # bf16 x bf16 -> f32 on the MXU
    acc_ref[...] += jnp.dot(p_ref[...], w_ref[...], preferred_element_type=jnp.float32)

    @pl.when(k == pl.num_programs(1) - 1)
    def _finalize():
        x = acc_ref[...]                                   # (tile_m, C_pad) f32
        conv_ref[...] = x.astype(conv_ref.dtype)
        xr = x.reshape(-1, 8, x.shape[-1])                 # sublane-staged partials (VALU adds)
        psum_ref[...] = jnp.sum(xr, axis=0)                # (8, C_pad)
        psq_ref[...] = jnp.sum(xr * xr, axis=0)


# ---------------- phase 2a: normalize + LeakyReLU, transposed store -> (N, C_out, H*W) ----------
def _bn_act_nchw_kernel(conv_ref, scale_ref, bias_ref, act_ref):
    y = conv_ref[...].astype(jnp.float32) * scale_ref[...] + bias_ref[...]
    y = jnp.maximum(y, NEG_SLOPE * y)                      # LeakyReLU(0.2)
    act_ref[...] = y.T[:act_ref.shape[0], :]               # (C_out, tile_hw), XLU transpose


# ---------------- phase 2b: fallback, (M, C) layout ----------------
def _bn_act_mc_kernel(conv_ref, scale_ref, bias_ref, act_ref):
    y = conv_ref[...].astype(jnp.float32) * scale_ref[...] + bias_ref[...]
    act_ref[...] = jnp.maximum(y, NEG_SLOPE * y)


@functools.partial(jax.jit, static_argnames=("out",))
def encoder_block(x, w, gamma, beta, out=False):
    """x: (N, C_in, H, W) f32; w: (C_out, C_in, 5, 5); gamma/beta: (C_out,)."""
    N, C_in, H, W = x.shape
    C_out = w.shape[0]
    Kk, P, S = 5, 2, 2
    H_out = (H + 2 * P - Kk) // S + 1
    W_out = (W + 2 * P - Kk) // S + 1
    HW = H_out * W_out
    M = N * HW
    Kdim = C_in * Kk * Kk

    # bf16 conv intermediate when the raw conv is not returned (kills 1/3 of the HBM round trip)
    conv_dtype = jnp.float32 if out else jnp.bfloat16
    conv_bytes = 4 if out else 2

    budget = _vmem_budget_bytes()
    C_pad = _round_up(C_out, LANE)
    K_pad, tile_k = _pick_tile_k(Kdim)
    n_k = K_pad // tile_k
    tile_m = _pick_tile_m(budget, tile_k, C_pad, conv_bytes, M)
    M_pad = _round_up(M, tile_m)
    n_m = M_pad // tile_m

    # --- im2col glue: single bf16 materialization, built directly in the final layout ---
    xh = jnp.transpose(x.astype(jnp.bfloat16), (0, 2, 3, 1))           # NHWC (input-sized)
    xp = jnp.pad(xh, ((0, 0), (P, P), (P, P), (0, 0)))
    taps = [xp[:, kh:kh + S * H_out:S, kw:kw + S * W_out:S, :]
            for kh in range(Kk) for kw in range(Kk)]
    patches = jnp.stack(taps, axis=-1)                                 # (N, Ho, Wo, C_in, 25)
    patches = patches.reshape(M, Kdim)                                 # K flattened as (C_in, kh, kw)
    patches = jnp.pad(patches, ((0, M_pad - M), (0, K_pad - Kdim)))    # no-op when pads are zero

    w2 = jnp.transpose(w.astype(jnp.float32).reshape(C_out, Kdim))     # (Kdim, C_out)
    w2 = jnp.pad(w2, ((0, K_pad - Kdim), (0, C_pad - C_out))).astype(jnp.bfloat16)

    # ---- phase 1: conv matmul + per-tile partial stats (M parallel, K arbitrary) ----
    conv_pad, psum, psq = pl.pallas_call(
        _conv_stats_kernel,
        out_shape=(jax.ShapeDtypeStruct((M_pad, C_pad), conv_dtype),
                   jax.ShapeDtypeStruct((n_m, 8, C_pad), jnp.float32),
                   jax.ShapeDtypeStruct((n_m, 8, C_pad), jnp.float32)),
        grid=(n_m, n_k),
        in_specs=[pl.BlockSpec((tile_m, tile_k), lambda i, k: (i, k)),
                  pl.BlockSpec((tile_k, C_pad), lambda i, k: (k, 0))],
        out_specs=(pl.BlockSpec((tile_m, C_pad), lambda i, k: (i, 0)),
                   pl.BlockSpec((None, 8, C_pad), lambda i, k: (i, 0, 0)),
                   pl.BlockSpec((None, 8, C_pad), lambda i, k: (i, 0, 0))),
        scratch_shapes=[pltpu.VMEM((tile_m, C_pad), jnp.float32)],
        compiler_params=pltpu.CompilerParams(
            dimension_semantics=("parallel", "arbitrary"),
            vmem_limit_bytes=budget),
    )(patches, w2)

    # ---- fold batch statistics into per-channel scale/bias (tiny, plain JAX) ----
    inv_m = 1.0 / M                                   # zero-padded rows contribute nothing
    mean = jnp.sum(psum, axis=(0, 1)) * inv_m
    var = jnp.maximum(jnp.sum(psq, axis=(0, 1)) * inv_m - mean * mean, 0.0)  # biased (train mode)
    gamma_p = jnp.pad(gamma.astype(jnp.float32), (0, C_pad - C_out))
    beta_p = jnp.pad(beta.astype(jnp.float32), (0, C_pad - C_out))
    sc = gamma_p * lax.rsqrt(var + EPS)
    scale = sc.reshape(1, C_pad)
    bias = (beta_p - mean * sc).reshape(1, C_pad)

    # ---- phase 2: normalize + LeakyReLU ----
    tile_hw = _pick_tile_hw(budget, HW, C_pad, C_out, conv_bytes)
    if tile_hw is not None:
        hw_blocks = HW // tile_hw
        act3 = pl.pallas_call(
            _bn_act_nchw_kernel,
            out_shape=jax.ShapeDtypeStruct((N, C_out, HW), jnp.float32),
            grid=(N, hw_blocks),
            in_specs=[pl.BlockSpec((tile_hw, C_pad),
                                   lambda n, j: (n * hw_blocks + j, 0)),
                      pl.BlockSpec((1, C_pad), lambda n, j: (0, 0)),
                      pl.BlockSpec((1, C_pad), lambda n, j: (0, 0))],
            out_specs=pl.BlockSpec((None, C_out, tile_hw), lambda n, j: (n, 0, j)),
            compiler_params=pltpu.CompilerParams(
                dimension_semantics=("parallel", "parallel"),
                vmem_limit_bytes=budget),
        )(conv_pad, scale, bias)
        act = act3.reshape(N, C_out, H_out, W_out)
    else:
        # fallback for odd spatial sizes: (M, C) layout + XLA NCHW transpose
        act_pad = pl.pallas_call(
            _bn_act_mc_kernel,
            out_shape=jax.ShapeDtypeStruct((M_pad, C_pad), jnp.float32),
            grid=(n_m,),
            in_specs=[pl.BlockSpec((tile_m, C_pad), lambda i: (i, 0)),
                      pl.BlockSpec((1, C_pad), lambda i: (0, 0)),
                      pl.BlockSpec((1, C_pad), lambda i: (0, 0))],
            out_specs=pl.BlockSpec((tile_m, C_pad), lambda i: (i, 0)),
            compiler_params=pltpu.CompilerParams(
                dimension_semantics=("parallel",),
                vmem_limit_bytes=budget),
        )(conv_pad, scale, bias)
        act = (act_pad[:M, :C_out].reshape(N, H_out, W_out, C_out)
               .transpose(0, 3, 1, 2))

    # TODO(synk): running_mean/running_var momentum(0.9) updates are training-time buffer
    # side effects with no influence on the forward output; not implemented.
    if out:
        conv_nchw = (conv_pad[:M, :C_out].reshape(N, H_out, W_out, C_out)
                     .transpose(0, 3, 1, 2))
        return act, conv_nchw
    return act


def reference(x, w, gamma, beta):
    # reference conv also uses bf16 inputs / f32 accumulation to match the kernel's MXU math
    conv = lax.conv_general_dilated(
        x.astype(jnp.bfloat16), w.astype(jnp.bfloat16),
        window_strides=(2, 2), padding=((2, 2), (2, 2)),
        dimension_numbers=('NCHW', 'OIHW', 'NCHW'),
        preferred_element_type=jnp.float32)
    mean = conv.mean(axis=(0, 2, 3), keepdims=True)
    var = ((conv - mean) ** 2).mean(axis=(0, 2, 3), keepdims=True)
    y = (conv - mean) * lax.rsqrt(var + EPS) * gamma.reshape(1, -1, 1, 1) + beta.reshape(1, -1, 1, 1)
    act = jnp.where(y >= 0.0, y, NEG_SLOPE * y)
    return act, conv


if __name__ == "__main__":
    key = jax.random.PRNGKey(0)
    kx, kw, kg, kb = jax.random.split(key, 4)

    N, C_in, H, W = 2, 4, 16, 16
    C_out = 8

    x = jax.random.normal(kx, (N, C_in, H, W), dtype=jnp.float32)
    w = 0.05 * jax.random.normal(kw, (C_out, C_in, 5, 5), dtype=jnp.float32)
    gamma = 1.0 + 0.1 * jax.random.normal(kg, (C_out,), dtype=jnp.float32)
    beta = 0.1 * jax.random.normal(kb, (C_out,), dtype=jnp.float32)

    # out=False path (bf16 conv intermediate)
    act = jax.block_until_ready(encoder_block(x, w, gamma, beta, out=False))

    # out=True path (f32 conv intermediate, returned)
    act2, conv_out = jax.block_until_ready(encoder_block(x, w, gamma, beta, out=True))

    act_ref, conv_ref = reference(x, w, gamma, beta)
    assert act.shape == (N, C_out, H // 2, W // 2)
    # out=False keeps the conv intermediate in bf16 (HBM-traffic saving) -> slightly looser tol
    assert jnp.allclose(act, act_ref, rtol=1e-2, atol=1e-2)
    # out=True keeps the conv path in f32
    assert jnp.allclose(act2, act_ref, rtol=2e-3, atol=2e-3)
    assert jnp.allclose(conv_out, conv_ref, rtol=2e-3, atol=2e-3)

    print("KERNEL_OK")
</pallas_src>

<mosaic_0001>
module attributes {stable_mosaic.version = 11 : i64} {
  func.func @_conv_stats_kernel(%arg0: i32, %arg1: i32, %arg2: memref<128x128xbf16, #tpu.memory_space<vmem>>, %arg3: memref<128x128xbf16, #tpu.memory_space<vmem>>, %arg4: memref<128x128xbf16, #tpu.memory_space<vmem>>, %arg5: memref<1x8x128xf32, #tpu.memory_space<vmem>>, %arg6: memref<1x8x128xf32, #tpu.memory_space<vmem>>, %arg7: memref<128x128xf32, #tpu.memory_space<vmem>>) attributes {dimension_semantics = [#tpu.dimension_semantics<parallel>, #tpu.dimension_semantics<arbitrary>], iteration_bounds = array<i64: 1, 1>, scalar_prefetch = 0 : i64, scratch_operands = 1 : i64, tpu.core_type = #tpu.core_type<tc>, window_params = [{transform_indices = @transform_0, window_bounds = array<i64: 128, 128>}, {transform_indices = @transform_1, window_bounds = array<i64: 128, 128>}, {transform_indices = @transform_2, window_bounds = array<i64: 128, 128>}, {transform_indices = @transform_3, window_bounds = array<i64: 1, 8, 128>}, {transform_indices = @transform_4, window_bounds = array<i64: 1, 8, 128>}]} {
    %c0_i32 = arith.constant 0 : i32
    %0 = arith.cmpi eq, %arg1, %c0_i32 : i32
    %1 = arith.extui %0 : i1 to i32
    %c0_i32_0 = arith.constant 0 : i32
    %2 = arith.cmpi ne, %1, %c0_i32_0 : i32
    scf.if %2 {
      %cst_10 = arith.constant 0.000000e+00 : f32
      %12 = vector.broadcast %cst_10 : f32 to vector<128x128xf32>
      %c0_11 = arith.constant 0 : index
      %c0_12 = arith.constant 0 : index
      %13 = vector.load %arg7[%c0_11, %c0_12] : memref<128x128xf32, #tpu.memory_space<vmem>>, vector<128x128xf32>
      tpu.vector_store %arg7[%c0_11, %c0_12], %12 {strides = array<i32>} : memref<128x128xf32, #tpu.memory_space<vmem>>, vector<128x128xf32>,
    } else {
    }
    %c0 = arith.constant 0 : index
    %c0_1 = arith.constant 0 : index
    %3 = vector.load %arg7[%c0, %c0_1] : memref<128x128xf32, #tpu.memory_space<vmem>>, vector<128x128xf32>
    %c0_2 = arith.constant 0 : index
    %c0_3 = arith.constant 0 : index
    %4 = vector.load %arg2[%c0_2, %c0_3] : memref<128x128xbf16, #tpu.memory_space<vmem>>, vector<128x128xbf16>
    %c0_4 = arith.constant 0 : index
    %c0_5 = arith.constant 0 : index
    %5 = vector.load %arg3[%c0_4, %c0_5] : memref<128x128xbf16, #tpu.memory_space<vmem>>, vector<128x128xbf16>
    %cst = arith.constant dense<0.000000e+00> : vector<128x128xf32>
    %6 = tpu.matmul %4, %5, %cst {dimension_numbers = #tpu.dot_dimension_numbers<[1], [0], [0], [1], [0, 0, 1, 1], [], []>} : vector<128x128xbf16>, vector<128x128xbf16>, vector<128x128xf32> -> vector<128x128xf32>
    %7 = arith.addf %3, %6 : vector<128x128xf32>
    %c0_6 = arith.constant 0 : index
    %c0_7 = arith.constant 0 : index
    %8 = vector.load %arg7[%c0_6, %c0_7] : memref<128x128xf32, #tpu.memory_space<vmem>>, vector<128x128xf32>
    tpu.vector_store %arg7[%c0_6, %c0_7], %7 {strides = array<i32>} : memref<128x128xf32, #tpu.memory_space<vmem>>, vector<128x128xf32>,
    %c0_i32_8 = arith.constant 0 : i32
    %9 = arith.cmpi eq, %arg1, %c0_i32_8 : i32
    %10 = arith.extui %9 : i1 to i32
    %c0_i32_9 = arith.constant 0 : i32
    %11 = arith.cmpi ne, %10, %c0_i32_9 : i32
    scf.if %11 {
      %c0_10 = arith.constant 0 : index
      %c0_11 = arith.constant 0 : index
      %12 = vector.load %arg7[%c0_10, %c0_11] : memref<128x128xf32, #tpu.memory_space<vmem>>, vector<128x128xf32>
      %13 = arith.truncf %12 : vector<128x128xf32> to vector<128x128xbf16>
      %c0_12 = arith.constant 0 : index
      %c0_13 = arith.constant 0 : index
      %14 = vector.load %arg4[%c0_12, %c0_13] : memref<128x128xbf16, #tpu.memory_space<vmem>>, vector<128x128xbf16>
      tpu.vector_store %arg4[%c0_12, %c0_13], %13 {strides = array<i32>} : memref<128x128xbf16, #tpu.memory_space<vmem>>, vector<128x128xbf16>,
      %15 = vector.shape_cast %12 : vector<128x128xf32> to vector<16x8x128xf32>
      %cst_14 = arith.constant dense<0.000000e+00> : vector<8x128xf32>
      %16 = vector.multi_reduction <add>, %15, %cst_14 [0] : vector<16x8x128xf32> to vector<8x128xf32>
      %c0_15 = arith.constant 0 : index
      %c0_16 = arith.constant 0 : index
      %c0_17 = arith.constant 0 : index
      %17 = vector.load %arg5[%c0_15, %c0_16, %c0_17] : memref<1x8x128xf32, #tpu.memory_space<vmem>>, vector<1x8x128xf32>
      %18 = vector.shape_cast %17 : vector<1x8x128xf32> to vector<8x128xf32>
      %19 = vector.shape_cast %16 : vector<8x128xf32> to vector<1x8x128xf32>
      tpu.vector_store %arg5[%c0_15, %c0_16, %c0_17], %19 {strides = array<i32>} : memref<1x8x128xf32, #tpu.memory_space<vmem>>, vector<1x8x128xf32>,
      %20 = arith.mulf %15, %15 : vector<16x8x128xf32>
      %cst_18 = arith.constant dense<0.000000e+00> : vector<8x128xf32>
      %21 = vector.multi_reduction <add>, %20, %cst_18 [0] : vector<16x8x128xf32> to vector<8x128xf32>
      %c0_19 = arith.constant 0 : index
      %c0_20 = arith.constant 0 : index
      %c0_21 = arith.constant 0 : index
      %22 = vector.load %arg6[%c0_19, %c0_20, %c0_21] : memref<1x8x128xf32, #tpu.memory_space<vmem>>, vector<1x8x128xf32>
      %23 = vector.shape_cast %22 : vector<1x8x128xf32> to vector<8x128xf32>
      %24 = vector.shape_cast %21 : vector<8x128xf32> to vector<1x8x128xf32>
      tpu.vector_store %arg6[%c0_19, %c0_20, %c0_21], %24 {strides = array<i32>} : memref<1x8x128xf32, #tpu.memory_space<vmem>>, vector<1x8x128xf32>,
    } else {
    }
    return
  }
  func.func @transform_0(%arg0: i32, %arg1: i32) -> (i32, i32) {
    %c0_i32 = arith.constant 0 : i32
    return %arg0, %arg1 : i32, i32
  }
  func.func @transform_1(%arg0: i32, %arg1: i32) -> (i32, i32) {
    %c0_i32 = arith.constant 0 : i32
    %c0_i32_0 = arith.constant 0 : i32
    return %arg1, %c0_i32 : i32, i32
  }
  func.func @transform_2(%arg0: i32, %arg1: i32) -> (i32, i32) {
    %c0_i32 = arith.constant 0 : i32
    %c0_i32_0 = arith.constant 0 : i32
    return %arg0, %c0_i32 : i32, i32
  }
  func.func @transform_3(%arg0: i32, %arg1: i32) -> (i32, i32, i32) {
    %c0_i32 = arith.constant 0 : i32
    %c0_i32_0 = arith.constant 0 : i32
    %c0_i32_1 = arith.constant 0 : i32
    return %arg0, %c0_i32, %c0_i32_0 : i32, i32, i32
  }
  func.func @transform_4(%arg0: i32, %arg1: i32) -> (i32, i32, i32) {
    %c0_i32 = arith.constant 0 : i32
    %c0_i32_0 = arith.constant 0 : i32
    %c0_i32_1 = arith.constant 0 : i32
    return %arg0, %c0_i32, %c0_i32_0 : i32, i32, i32
  }
}

module attributes {stable_mosaic.version = 11 : i64} {
  func.func @_bn_act_nchw_kernel(%arg0: i32, %arg1: i32, %arg2: memref<64x128xbf16, #tpu.memory_space<vmem>>, %arg3: memref<1x128xf32, #tpu.memory_space<vmem>>, %arg4: memref<1x128xf32, #tpu.memory_space<vmem>>, %arg5: memref<1x8x64xf32, #tpu.memory_space<vmem>>) attributes {dimension_semantics = [#tpu.dimension_semantics<parallel>, #tpu.dimension_semantics<parallel>], iteration_bounds = array<i64: 2, 1>, scalar_prefetch = 0 : i64, scratch_operands = 0 : i64, tpu.core_type = #tpu.core_type<tc>, window_params = [{transform_indices = @transform_0, window_bounds = array<i64: 64, 128>}, {pipeline_mode = #tpu.pipeline_mode<synchronous>, transform_indices = @transform_1, window_bounds = array<i64: 1, 128>}, {pipeline_mode = #tpu.pipeline_mode<synchronous>, transform_indices = @transform_2, window_bounds = array<i64: 1, 128>}, {transform_indices = @transform_3, window_bounds = array<i64: 1, 8, 64>}]} {
    %c0 = arith.constant 0 : index
    %c0_0 = arith.constant 0 : index
    %0 = vector.load %arg2[%c0, %c0_0] : memref<64x128xbf16, #tpu.memory_space<vmem>>, vector<64x128xbf16>
    %1 = arith.extf %0 : vector<64x128xbf16> to vector<64x128xf32>
    %c0_1 = arith.constant 0 : index
    %c0_2 = arith.constant 0 : index
    %2 = vector.load %arg3[%c0_1, %c0_2] : memref<1x128xf32, #tpu.memory_space<vmem>>, vector<1x128xf32>
    %3 = vector.broadcast %2 : vector<1x128xf32> to vector<64x128xf32>
    %4 = arith.mulf %1, %3 : vector<64x128xf32>
    %c0_3 = arith.constant 0 : index
    %c0_4 = arith.constant 0 : index
    %5 = vector.load %arg4[%c0_3, %c0_4] : memref<1x128xf32, #tpu.memory_space<vmem>>, vector<1x128xf32>
    %6 = vector.broadcast %5 : vector<1x128xf32> to vector<64x128xf32>
    %7 = arith.addf %4, %6 : vector<64x128xf32>
    %cst = arith.constant 2.000000e-01 : f32
    %8 = vector.broadcast %cst : f32 to vector<64x128xf32>
    %9 = arith.mulf %8, %7 : vector<64x128xf32>
    %10 = arith.maximumf %7, %9 : vector<64x128xf32>
    %11 = tpu.transpose %10, [1, 0] : vector<64x128xf32> -> vector<128x64xf32>
    %12 = vector.extract_strided_slice %11 {offsets = [0, 0], sizes = [8, 64], strides = [1, 1]} : vector<128x64xf32> to vector<8x64xf32>
    %c0_5 = arith.constant 0 : index
    %c0_6 = arith.constant 0 : index
    %c0_7 = arith.constant 0 : index
    %13 = vector.load %arg5[%c0_5, %c0_6, %c0_7] : memref<1x8x64xf32, #tpu.memory_space<vmem>>, vector<1x8x64xf32>
    %14 = vector.shape_cast %13 : vector<1x8x64xf32> to vector<8x64xf32>
    %15 = vector.shape_cast %12 : vector<8x64xf32> to vector<1x8x64xf32>
    tpu.vector_store %arg5[%c0_5, %c0_6, %c0_7], %15 {strides = array<i32>} : memref<1x8x64xf32, #tpu.memory_space<vmem>>, vector<1x8x64xf32>,
    return
  }
  func.func @transform_0(%arg0: i32, %arg1: i32) -> (i32, i32) {
    %c1_i32 = arith.constant 1 : i32
    %0 = arith.muli %arg0, %c1_i32 : i32
    %1 = arith.addi %0, %arg1 : i32
    %c0_i32 = arith.constant 0 : i32
    %c0_i32_0 = arith.constant 0 : i32
    return %1, %c0_i32 : i32, i32
  }
  func.func @transform_1(%arg0: i32, %arg1: i32) -> (i32, i32) {
    %c0_i32 = arith.constant 0 : i32
    %c0_i32_0 = arith.constant 0 : i32
    %c0_i32_1 = arith.constant 0 : i32
    return %c0_i32, %c0_i32_0 : i32, i32
  }
  func.func @transform_2(%arg0: i32, %arg1: i32) -> (i32, i32) {
    %c0_i32 = arith.constant 0 : i32
    %c0_i32_0 = arith.constant 0 : i32
    %c0_i32_1 = arith.constant 0 : i32
    return %c0_i32, %c0_i32_0 : i32, i32
  }
  func.func @transform_3(%arg0: i32, %arg1: i32) -> (i32, i32, i32) {
    %c0_i32 = arith.constant 0 : i32
    %c0_i32_0 = arith.constant 0 : i32
    return %arg0, %c0_i32, %arg1 : i32, i32, i32
  }
}

</mosaic_0001>

<llo_original>
// kernel: encoder_block.3
$region0: #{encoder_block.3}
  #allocation0 [shape = 'u32[]', space=smem, size = 0x4, offset = 0x4, fixed_abs, tag = 'smem constant byte address 0x4 - core index']
  #allocation1 [shape = 'u32[144,128]{1,0:T(1,128)}', space=vmem, size = 0x12000, scoped, tag = 'internal scratch']
  %s0 = inlined_call_operand.vmem [shape: bf16[128,128], index: 0, kind: input, shape index: {}]
  %s1 = inlined_call_operand.vmem [shape: f32[1,128], index: 1, kind: input, shape index: {}]
  %s2 = inlined_call_operand.vmem [shape: f32[1,128], index: 2, kind: input, shape index: {}]
  %s3 = inlined_call_operand.vmem [shape: f32[2,8,64], index: 3, kind: output, shape index: {}]
  %s4 = sld [smem:[#allocation0]]
  $region45: #{encoder_block.3} parent=0
    _
  %s6 = ssub.s32 1, %s4
  %s7 = scalar_select 0, %s6, %s4
  loop: start=0, step=1, limit=4
  $region2: #{encoder_block.3} parent=0 // loop_pre_header
    _
  $region3: #{encoder_block.3} parent=0 // loop_header
    %s9 = sphi 0, %s13
    %p10 = scmp.ge.s32.totalorder %s9, 4
    %s16 = sphi 0, %s28
    %s17 = sphi 0, %s24
    %s18 = sphi 0, %s16
    %s19 = sphi 0, %s17
    %s20 = sphi 0, %s18
    %s21 = sphi 0, %s19
    %s33 = sphi 0, %s35
    %s36 = sphi 0, %s33
    %s37 = sphi 0, %s36
    %s53 = sphi 0, %s37
    %s57 = sphi 0, %s57
    %s59 = sphi 0, %s57
    %s60 = sphi 0, %s59
    %s74 = sphi 0, %s60
    %s78 = sphi 0, %s78
    %s80 = sphi 0, %s78
    %s81 = sphi 0, %s80
    %s95 = sphi 0, %s81
    %s103 = sphi 0, %s105
    %s106 = sphi 0, %s103
    %s107 = sphi 0, %s106
    %s123 = sphi 0, %s107
  $region4: #{encoder_block.3} parent=0 // loop_header_branch
    %12 = sbr.rel (%p10) target = $region8
  $region5: #{encoder_block.3} parent=0 // loop_body
    %s14 = ssub.s32 %s9, 1
    %s15 = ssub.s32 %s9, 2
    %s22 = sadd.s32 1, %s17
    %p23 = scmp.ge.s32.totalorder %s22, 1
    %s24 = scalar_select %p23, 0, %s22
    %s25 = sadd.s32 1, %s16
    %s26 = scalar_select %p23, %s25, %s16
    %p27 = scmp.ge.s32.totalorder %s26, 2
    %s28 = scalar_select %p27, 0, %s26
    %s29 = sadd.s32 %s16, %s17
    %s30 = sadd.s32 %s28, %s24
    %s31 = ssub.s32 %s29, %s30
    %p32 = scmp.eq.s32.totalorder %s31, 0
    %s34 = sadd.s32 %s33, 1
    %s35 = scalar_select %p32, %s33, %s34
    %p38 = pneg %p32
    %p39 = scmp.eq.s32.totalorder %s9, 1
    %p40 = por %p38, %p39
    %p41 = scmp.ne.s32.totalorder %s33, %s36
    %p42 = scmp.eq.s32.totalorder %s9, 0
    %p43 = por %p41, %p42
    %p44 = scmp.ne.s32.totalorder %s33, %s36
    %p45 = scmp.eq.s32.totalorder %s14, 1
    %p46 = por %p44, %p45
    %p47 = scmp.ne.s32.totalorder %s36, %s37
    %p48 = scmp.eq.s32.totalorder %s14, 0
    %p49 = por %p47, %p48
    %p50 = scmp.ne.s32.totalorder %s36, %s37
    %p51 = scmp.eq.s32.totalorder %s15, 1
    %p52 = por %p50, %p51
    %p54 = scmp.ne.s32.totalorder %s37, %s53
    %p55 = scmp.eq.s32.totalorder %s15, 0
    %p56 = por %p54, %p55
    %s58 = sadd.s32 %s57, 1
    %p61 = scmp.eq.s32.totalorder %s9, 1
    %p62 = scmp.ne.s32.totalorder %s57, %s59
    %p63 = scmp.eq.s32.totalorder %s9, 0
    %p64 = por %p62, %p63
    %p65 = scmp.ne.s32.totalorder %s57, %s59
    %p66 = scmp.eq.s32.totalorder %s14, 1
    %p67 = por %p65, %p66
    %p68 = scmp.ne.s32.totalorder %s59, %s60
    %p69 = scmp.eq.s32.totalorder %s14, 0
    %p70 = por %p68, %p69
    %p71 = scmp.ne.s32.totalorder %s59, %s60
    %p72 = scmp.eq.s32.totalorder %s15, 1
    %p73 = por %p71, %p72
    %p75 = scmp.ne.s32.totalorder %s60, %s74
    %p76 = scmp.eq.s32.totalorder %s15, 0
    %p77 = por %p75, %p76
    %s79 = sadd.s32 %s78, 1
    %p82 = scmp.eq.s32.totalorder %s9, 1
    %p83 = scmp.ne.s32.totalorder %s78, %s80
    %p84 = scmp.eq.s32.totalorder %s9, 0
    %p85 = por %p83, %p84
    %p86 = scmp.ne.s32.totalorder %s78, %s80
    %p87 = scmp.eq.s32.totalorder %s14, 1
    %p88 = por %p86, %p87
    %p89 = scmp.ne.s32.totalorder %s80, %s81
    %p90 = scmp.eq.s32.totalorder %s14, 0
    %p91 = por %p89, %p90
    %p92 = scmp.ne.s32.totalorder %s80, %s81
    %p93 = scmp.eq.s32.totalorder %s15, 1
    %p94 = por %p92, %p93
    %p96 = scmp.ne.s32.totalorder %s81, %s95
    %p97 = scmp.eq.s32.totalorder %s15, 0
    %p98 = por %p96, %p97
    %s99 = ssub.s32 %s16, %s28
    %s100 = ssub.s32 %s17, %s24
    %s101 = sor.u32 %s99, %s100
    %p102 = scmp.eq.s32.totalorder %s101, 0
    %s104 = sadd.s32 %s103, 1
    %s105 = scalar_select %p102, %s103, %s104
    %p108 = pneg %p102
    %p109 = scmp.eq.s32.totalorder %s9, 1
    %p110 = por %p108, %p109
    %p111 = scmp.ne.s32.totalorder %s103, %s106
    %p112 = scmp.eq.s32.totalorder %s9, 0
    %p113 = por %p111, %p112
    %p114 = scmp.ne.s32.totalorder %s103, %s106
    %p115 = scmp.eq.s32.totalorder %s14, 1
    %p116 = por %p114, %p115
    %p117 = scmp.ne.s32.totalorder %s106, %s107
    %p118 = scmp.eq.s32.totalorder %s14, 0
    %p119 = por %p117, %p118
    %p120 = scmp.ne.s32.totalorder %s106, %s107
    %p121 = scmp.eq.s32.totalorder %s15, 1
    %p122 = por %p120, %p121
    %p124 = scmp.ne.s32.totalorder %s107, %s123
    %p125 = scmp.eq.s32.totalorder %s15, 0
    %p126 = por %p124, %p125
    %p127 = scmp.le.s32.totalorder 1, %s9
    %p128 = scmp.lt.s32.totalorder %s9, 3
    %p129 = pnand %p127, %p128
    %p130 = pneg %p129
    // Predicated region
    $region9: #{encoder_block.3} parent=5 // pred_check
      _
    $region10: #{encoder_block.3} parent=5 // pred_check_branch
      %132 = sbr.rel (%p129) target = $region12
    $region11: #{encoder_block.3} parent=5 // pred_region
      %s133 = ssub.s32 %s9, 1
      // Predicated region
      $region13: #{encoder_block.3} parent=11 // pred_check
        %p134 = pneg %p70
      $region14: #{encoder_block.3} parent=11 // pred_check_branch
        %136 = sbr.rel (%p134) target = $region16
      $region15: #{encoder_block.3} parent=11 // pred_region
        _
      $region16: #{encoder_block.3} parent=11 // pred_fallthru
        _
      // Predicated region
      $region17: #{encoder_block.3} parent=11 // pred_check
        %p137 = pneg %p91
      $region18: #{encoder_block.3} parent=11 // pred_check_branch
        %139 = sbr.rel (%p137) target = $region20
      $region19: #{encoder_block.3} parent=11 // pred_region
        _
      $region20: #{encoder_block.3} parent=11 // pred_fallthru
        _
    $region12: #{encoder_block.3} parent=5 // pred_fallthru
      _
    %p140 = scmp.lt.s32.totalorder %s9, 2
    // Predicated region
    $region21: #{encoder_block.3} parent=5 // pred_check
      %p141 = pneg %p140
    $region22: #{encoder_block.3} parent=5 // pred_check_branch
      %143 = sbr.rel (%p141) target = $region24
    $region23: #{encoder_block.3} parent=5 // pred_region
      // Predicated region
      $region25: #{encoder_block.3} parent=23 // pred_check
        %p144 = pneg %p43
      $region26: #{encoder_block.3} parent=23 // pred_check_branch
        %146 = sbr.rel (%p144) target = $region28
      $region27: #{encoder_block.3} parent=23 // pred_region
        %s147 = sadd.s32 %s16, %s17
        %s148 = smul.u32 8, %s147
        %p149 = scmp.lt.s32.totalorder %s148, 15
        %s150 = scalar_select %p149, %s148, 15
        %s151 = smul.addr %s150, 4
        %s152 = scalar_lea.vmem %s0, %s151
        %s153 = sadd.s32 %s16, %s17
        %s154 = smul.u32 8, %s153
      $region28: #{encoder_block.3} parent=23 // pred_fallthru
        _
    $region24: #{encoder_block.3} parent=5 // pred_fallthru
      _
    %p155 = scmp.le.s32.totalorder 1, %s9
    %p156 = scmp.lt.s32.totalorder %s9, 3
    %p157 = pnand %p155, %p156
    %p158 = pneg %p157
    // Predicated region
    $region29: #{encoder_block.3} parent=5 // pred_check
      _
    $region30: #{encoder_block.3} parent=5 // pred_check_branch
      %160 = sbr.rel (%p157) target = $region32
    $region31: #{encoder_block.3} parent=5 // pred_region
      %s161 = ssub.s32 %s9, 1
      %s162 = sadd.s32 %s18, %s19
      %s163 = smul.u32 8, %s162
      %p164 = scmp.lt.s32.totalorder %s163, 15
      %s165 = scalar_select %p164, %s163, 15
      %s166 = smul.addr %s165, 4
      %s167 = scalar_lea.vmem %s0, %s166
      %p168 = pneg %p49
      %p169 = pneg %p46
      %p170 = pneg %p70
      %p171 = pneg %p67
      %p172 = pneg %p91
      %p173 = pneg %p88
      %p174 = pneg %p119
      %p175 = pneg %p116
      %p176 = scmp.lt.s32.totalorder %s18, 1
      %s177 = scalar_select %p176, %s18, 1
      %p178 = scmp.lt.s32.totalorder %s19, 0
      %s179 = scalar_select %p178, %s19, 0
      %s180 = sadd.s32 %s179, %s177
      %s181 = smul.addr %s180, 8
      %s182 = scalar_lea.vmem %s3, %s181
      %s183 = sadd.s32 %s18, %s19
      %s184 = smul.u32 8, %s183
      %p185 = scmp.lt.s32.totalorder %s184, 15
      %s186 = scalar_select %p185, %s184, 15
      %s187 = smul.addr %s186, 4
      %s188 = scalar_lea.vmem %s0, %s187
      %s189 = sadd.s32 %s18, %s19
      %s190 = smul.u32 8, %s189
      %p191 = scmp.lt.s32.totalorder %s18, 1
      %s192 = scalar_select %p191, %s18, 1
      %p193 = scmp.lt.s32.totalorder %s19, 0
      %s194 = scalar_select %p193, %s19, 0
      %s195 = sadd.s32 %s194, %s192
      %s196 = smul.addr %s195, 8
      %s197 = scalar_lea.vmem %s3, %s196
      %v198 = vld [vmem:[%s188] sm:$0xf]
      %v199 = vld [vmem:[%s188 + $0x4] sm:$0xf]
      %v200 = vld [vmem:[%s188 + $0x8] sm:$0xf]
      %v201 = vld [vmem:[%s188 + $0xc] sm:$0xf]
      %v202 = vld [vmem:[%s188 + $0x10] sm:$0xf]
      %v203 = vld [vmem:[%s188 + $0x14] sm:$0xf]
      %v204 = vld [vmem:[%s188 + $0x18] sm:$0xf]
      %v205 = vld [vmem:[%s188 + $0x1c] sm:$0xf]
      %v206 = vunpack.c.l.bf16 %v198
      %v207 = vunpack.c.l.bf16 %v199
      %v208 = vunpack.c.l.bf16 %v200
      %v209 = vunpack.c.l.bf16 %v201
      %v210 = vunpack.c.l.bf16 %v202
      %v211 = vunpack.c.l.bf16 %v203
      %v212 = vunpack.c.l.bf16 %v204
      %v213 = vunpack.c.l.bf16 %v205
      %v214 = vld [vmem:[%s1] sm:$0x1]
      %v216 = vlaneseq
      %v217 = vshrl.u32 %v216, 7
      %v218 = vsub.s32 0, %v217
      %v219 = vrot.slane %v214, %v218
      %v221 = vmul.f32 %v206, %v219
      %v222 = vmul.f32 %v207, %v219
      %v223 = vmul.f32 %v208, %v219
      %v224 = vmul.f32 %v209, %v219
      %v225 = vmul.f32 %v210, %v219
      %v226 = vmul.f32 %v211, %v219
      %v227 = vmul.f32 %v212, %v219
      %v228 = vmul.f32 %v213, %v219
      %v229 = vld [vmem:[%s2] sm:$0x1]
      %v231 = vlaneseq
      %v232 = vshrl.u32 %v231, 7
      %v233 = vsub.s32 0, %v232
      %v234 = vrot.slane %v229, %v233
      %v236 = vadd.f32 %v221, %v234
      %v237 = vadd.f32 %v222, %v234
      %v238 = vadd.f32 %v223, %v234
      %v239 = vadd.f32 %v224, %v234
      %v240 = vadd.f32 %v225, %v234
      %v241 = vadd.f32 %v226, %v234
      %v242 = vadd.f32 %v227, %v234
      %v243 = vadd.f32 %v228, %v234
      %v244 = vmul.f32 %v236, 0.2
      %v245 = vmul.f32 %v237, 0.2
      %v246 = vmul.f32 %v238, 0.2
      %v247 = vmul.f32 %v239, 0.2
      %v248 = vmul.f32 %v240, 0.2
      %v249 = vmul.f32 %v241, 0.2
      %v250 = vmul.f32 %v242, 0.2
      %v251 = vmul.f32 %v243, 0.2
      %v252 = vmax.f32 %v236, %v244
      %v253 = vmax.f32 %v237, %v245
      %v254 = vmax.f32 %v238, %v246
      %v255 = vmax.f32 %v239, %v247
      %v256 = vmax.f32 %v240, %v248
      %v257 = vmax.f32 %v241, %v249
      %v258 = vmax.f32 %v242, %v250
      %v259 = vmax.f32 %v243, %v251
      %260 = vxpose.xlu0.b32.start [1/16] %v252, 128
      %261 = vxpose.xlu0.b32.cont [2/16] %v253, 128
      %262 = vxpose.xlu0.b32.cont [3/16] %v254, 128
      %263 = vxpose.xlu0.b32.cont [4/16] %v255, 128
      %264 = vxpose.xlu0.b32.cont [5/16] %v256, 128
      %265 = vxpose.xlu0.b32.cont [6/16] %v257, 128
      %266 = vxpose.xlu0.b32.cont [7/16] %v258, 128
      %267 = vxpose.xlu0.b32.cont [8/16] %v259, 128
      %268 = vxpose.xlu0.b32.cont [9/16] 0.0, 128
      %269 = vxpose.xlu0.b32.cont [10/16] 0.0, 128
      %270 = vxpose.xlu0.b32.cont [11/16] 0.0, 128
      %271 = vxpose.xlu0.b32.cont [12/16] 0.0, 128
      %272 = vxpose.xlu0.b32.cont [13/16] 0.0, 128
      %273 = vxpose.xlu0.b32.cont [14/16] 0.0, 128
      %274 = vxpose.xlu0.b32.cont [15/16] 0.0, 128
      %275 = vxpose.xlu0.b32.end [16/16] 0.0, 128
      %v276 = vpop.trf.xlu0
      %v277 = vpop.trf.xlu0
      %v278 = vpop.trf.xlu0
      %v279 = vpop.trf.xlu0
      %v280 = vpop.trf.xlu0
      %v281 = vpop.trf.xlu0
      %v282 = vpop.trf.xlu0
      %v283 = vpop.trf.xlu0
      %v284 = vpop.trf.xlu0
      %v285 = vpop.trf.xlu0
      %v286 = vpop.trf.xlu0
      %v287 = vpop.trf.xlu0
      %v288 = vpop.trf.xlu0
      %v289 = vpop.trf.xlu0
      %v290 = vpop.trf.xlu0
      %v291 = vpop.trf.xlu0
      %vm292 = vcmask 523264
      %293 = vst.msk [vmem:[%s197] sm:$0xff] %vm292, %v276
      %p294 = scmp.lt.s32.totalorder %s18, 1
      %s295 = scalar_select %p294, %s18, 1
      %p296 = scmp.lt.s32.totalorder %s19, 0
      %s297 = scalar_select %p296, %s19, 0
      %s298 = sadd.s32 %s297, %s295
      %s299 = smul.addr %s298, 8
      %s300 = scalar_lea.vmem %s3, %s299
      // Predicated region
      $region33: #{encoder_block.3} parent=31 // pred_check
        %p301 = pneg %p116
      $region34: #{encoder_block.3} parent=31 // pred_check_branch
        %303 = sbr.rel (%p301) target = $region36
      $region35: #{encoder_block.3} parent=31 // pred_region
        _
      $region36: #{encoder_block.3} parent=31 // pred_fallthru
        _
    $region32: #{encoder_block.3} parent=5 // pred_fallthru
      _
    %p304 = scmp.le.s32.totalorder 2, %s9
    // Predicated region
    $region37: #{encoder_block.3} parent=5 // pred_check
      %p305 = pneg %p304
    $region38: #{encoder_block.3} parent=5 // pred_check_branch
      %307 = sbr.rel (%p305) target = $region40
    $region39: #{encoder_block.3} parent=5 // pred_region
      %s308 = ssub.s32 %s9, 2
      // Predicated region
      $region41: #{encoder_block.3} parent=39 // pred_check
        %p309 = pneg %p122
      $region42: #{encoder_block.3} parent=39 // pred_check_branch
        %311 = sbr.rel (%p309) target = $region44
      $region43: #{encoder_block.3} parent=39 // pred_region
        %p312 = scmp.lt.s32.totalorder %s20, 1
        %s313 = scalar_select %p312, %s20, 1
        %p314 = scmp.lt.s32.totalorder %s21, 0
        %s315 = scalar_select %p314, %s21, 0
        %s316 = sadd.s32 %s315, %s313
        %s317 = smul.addr %s316, 8
        %s318 = scalar_lea.vmem %s3, %s317
      $region44: #{encoder_block.3} parent=39 // pred_fallthru
        _
    $region40: #{encoder_block.3} parent=5 // pred_fallthru
      _
  $region6: #{encoder_block.3} parent=0 // loop_footer
    %s13 = sadd.s32 1, %s9
  $region7: #{encoder_block.3} parent=0 // loop_footer_branch
    %8 = sbr.rel target = $region3
  $region8: #{encoder_block.3} parent=0 // loop_exit
    _

// kernel: encoder_block.2
$region0: #{encoder_block.2}
  #allocation0 [shape = 'u32[]', space=smem, size = 0x4, offset = 0x4, fixed_abs, tag = 'smem constant byte address 0x4 - core index']
  #allocation1 [shape = 'u32[144,128]{1,0:T(1,128)}', space=vmem, size = 0x12000, scoped, tag = 'internal scratch']
  #allocation2 [shape = 'f32[128,128]{1,0:T(8,128)}', space=vmem, size = 0x10000, scoped, tag = 'scratch operand']
  %s0 = inlined_call_operand.vmem [shape: bf16[128,128], index: 0, kind: input, shape index: {}]
  %s1 = inlined_call_operand.vmem [shape: bf16[128,128], index: 1, kind: input, shape index: {}]
  %s2 = inlined_call_operand.vmem [shape: bf16[128,128], index: 2, kind: output, shape index: {0}]
  %s3 = inlined_call_operand.vmem [shape: f32[1,8,128], index: 3, kind: output, shape index: {1}]
  %s4 = inlined_call_operand.vmem [shape: f32[1,8,128], index: 4, kind: output, shape index: {2}]
  %5 = xla_tuple %s2, %s3, %s4
  %s6 = sld [smem:[#allocation0]]
  $region42: #{encoder_block.2} parent=0
    _
  %s8 = ssub.s32 1, %s6
  %s9 = scalar_select 0, %s8, %s6
  // Predicated region
  $region2: #{encoder_block.2} parent=0 // pred_check
    _
  $region3: #{encoder_block.2} parent=0 // pred_check_branch
    %11 = sbr.rel (0) target = $region5
  $region4: #{encoder_block.2} parent=0 // pred_region
    _
  $region5: #{encoder_block.2} parent=0 // pred_fallthru
    _
  // Predicated region
  $region6: #{encoder_block.2} parent=0 // pred_check
    _
  $region7: #{encoder_block.2} parent=0 // pred_check_branch
    %13 = sbr.rel (0) target = $region9
  $region8: #{encoder_block.2} parent=0 // pred_region
    _
  $region9: #{encoder_block.2} parent=0 // pred_fallthru
    _
  %p15 = scmp.eq.s32.totalorder 0, 0
  // Predicated region
  $region10: #{encoder_block.2} parent=0 // pred_check
    %p16 = pneg %p15
  $region11: #{encoder_block.2} parent=0 // pred_check_branch
    %18 = sbr.rel (%p16) target = $region13
  $region12: #{encoder_block.2} parent=0 // pred_region
    %19 = vst [vmem:[#allocation2] sm:$0xff] 0.0
    %20 = vst [vmem:[#allocation2 + $0x8] sm:$0xff] 0.0
    %21 = vst [vmem:[#allocation2 + $0x10] sm:$0xff] 0.0
    %22 = vst [vmem:[#allocation2 + $0x18] sm:$0xff] 0.0
    %23 = vst [vmem:[#allocation2 + $0x20] sm:$0xff] 0.0
    %24 = vst [vmem:[#allocation2 + $0x28] sm:$0xff] 0.0
    %25 = vst [vmem:[#allocation2 + $0x30] sm:$0xff] 0.0
    %26 = vst [vmem:[#allocation2 + $0x38] sm:$0xff] 0.0
    %27 = vst [vmem:[#allocation2 + $0x40] sm:$0xff] 0.0
    %28 = vst [vmem:[#allocation2 + $0x48] sm:$0xff] 0.0
    %29 = vst [vmem:[#allocation2 + $0x50] sm:$0xff] 0.0
    %30 = vst [vmem:[#allocation2 + $0x58] sm:$0xff] 0.0
    %31 = vst [vmem:[#allocation2 + $0x60] sm:$0xff] 0.0
    %32 = vst [vmem:[#allocation2 + $0x68] sm:$0xff] 0.0
    %33 = vst [vmem:[#allocation2 + $0x70] sm:$0xff] 0.0
    %34 = vst [vmem:[#allocation2 + $0x78] sm:$0xff] 0.0
  $region13: #{encoder_block.2} parent=0 // pred_fallthru
    _
  %v35 = vld [vmem:[#allocation2] sm:$0xff]
  %v36 = vld [vmem:[#allocation2 + $0x8] sm:$0xff]
  %v37 = vld [vmem:[#allocation2 + $0x10] sm:$0xff]
  %v38 = vld [vmem:[#allocation2 + $0x18] sm:$0xff]
  %v39 = vld [vmem:[#allocation2 + $0x20] sm:$0xff]
  %v40 = vld [vmem:[#allocation2 + $0x28] sm:$0xff]
  %v41 = vld [vmem:[#allocation2 + $0x30] sm:$0xff]
  %v42 = vld [vmem:[#allocation2 + $0x38] sm:$0xff]
  %v43 = vld [vmem:[#allocation2 + $0x40] sm:$0xff]
  %v44 = vld [vmem:[#allocation2 + $0x48] sm:$0xff]
  %v45 = vld [vmem:[#allocation2 + $0x50] sm:$0xff]
  %v46 = vld [vmem:[#allocation2 + $0x58] sm:$0xff]
  %v47 = vld [vmem:[#allocation2 + $0x60] sm:$0xff]
  %v48 = vld [vmem:[#allocation2 + $0x68] sm:$0xff]
  %v49 = vld [vmem:[#allocation2 + $0x70] sm:$0xff]
  %v50 = vld [vmem:[#allocation2 + $0x78] sm:$0xff]
  %v51 = vld [vmem:[%s0] sm:$0xf]
  %v52 = vld [vmem:[%s0 + $0x4] sm:$0xf]
  %v53 = vld [vmem:[%s0 + $0x8] sm:$0xf]
  %v54 = vld [vmem:[%s0 + $0xc] sm:$0xf]
  %v55 = vld [vmem:[%s0 + $0x10] sm:$0xf]
  %v56 = vld [vmem:[%s0 + $0x14] sm:$0xf]
  %v57 = vld [vmem:[%s0 + $0x18] sm:$0xf]
  %v58 = vld [vmem:[%s0 + $0x1c] sm:$0xf]
  %v59 = vld [vmem:[%s0 + $0x20] sm:$0xf]
  %v60 = vld [vmem:[%s0 + $0x24] sm:$0xf]
  %v61 = vld [vmem:[%s0 + $0x28] sm:$0xf]
  %v62 = vld [vmem:[%s0 + $0x2c] sm:$0xf]
  %v63 = vld [vmem:[%s0 + $0x30] sm:$0xf]
  %v64 = vld [vmem:[%s0 + $0x34] sm:$0xf]
  %v65 = vld [vmem:[%s0 + $0x38] sm:$0xf]
  %v66 = vld [vmem:[%s0 + $0x3c] sm:$0xf]
  %v67 = vld [vmem:[%s1] sm:$0xf]
  %v68 = vld [vmem:[%s1 + $0x4] sm:$0xf]
  %v69 = vld [vmem:[%s1 + $0x8] sm:$0xf]
  %v70 = vld [vmem:[%s1 + $0xc] sm:$0xf]
  %v71 = vld [vmem:[%s1 + $0x10] sm:$0xf]
  %v72 = vld [vmem:[%s1 + $0x14] sm:$0xf]
  %v73 = vld [vmem:[%s1 + $0x18] sm:$0xf]
  %v74 = vld [vmem:[%s1 + $0x1c] sm:$0xf]
  %v75 = vld [vmem:[%s1 + $0x20] sm:$0xf]
  %v76 = vld [vmem:[%s1 + $0x24] sm:$0xf]
  %v77 = vld [vmem:[%s1 + $0x28] sm:$0xf]
  %v78 = vld [vmem:[%s1 + $0x2c] sm:$0xf]
  %v79 = vld [vmem:[%s1 + $0x30] sm:$0xf]
  %v80 = vld [vmem:[%s1 + $0x34] sm:$0xf]
  %v81 = vld [vmem:[%s1 + $0x38] sm:$0xf]
  %v82 = vld [vmem:[%s1 + $0x3c] sm:$0xf]
  %v99 = vunpack.c.l.b16 %v51
  %v100 = vunpack.c.l.b16 %v52
  %v101 = vunpack.c.l.b16 %v53
  %v102 = vunpack.c.l.b16 %v54
  %v103 = vunpack.c.l.b16 %v55
  %v104 = vunpack.c.l.b16 %v56
  %v105 = vunpack.c.l.b16 %v57
  %v106 = vunpack.c.l.b16 %v58
  %v107 = vunpack.c.l.b16 %v59
  %v108 = vunpack.c.l.b16 %v60
  %v109 = vunpack.c.l.b16 %v61
  %v110 = vunpack.c.l.b16 %v62
  %v111 = vunpack.c.l.b16 %v63
  %v112 = vunpack.c.l.b16 %v64
  %v113 = vunpack.c.l.b16 %v65
  %v114 = vunpack.c.l.b16 %v66
  %v115 = vpack.c.b16 %v100, %v99
  %v116 = vpack.c.b16 %v102, %v101
  %v117 = vpack.c.b16 %v104, %v103
  %v118 = vpack.c.b16 %v106, %v105
  %v119 = vpack.c.b16 %v108, %v107
  %v120 = vpack.c.b16 %v110, %v109
  %v121 = vpack.c.b16 %v112, %v111
  %v122 = vpack.c.b16 %v114, %v113
  %v147 = vunpack.c.l.b16 %v67
  %v148 = vunpack.c.l.b16 %v68
  %v149 = vunpack.c.l.b16 %v69
  %v150 = vunpack.c.l.b16 %v70
  %v151 = vunpack.c.l.b16 %v71
  %v152 = vunpack.c.l.b16 %v72
  %v153 = vunpack.c.l.b16 %v73
  %v154 = vunpack.c.l.b16 %v74
  %v155 = vunpack.c.l.b16 %v75
  %v156 = vunpack.c.l.b16 %v76
  %v157 = vunpack.c.l.b16 %v77
  %v158 = vunpack.c.l.b16 %v78
  %v159 = vunpack.c.l.b16 %v79
  %v160 = vunpack.c.l.b16 %v80
  %v161 = vunpack.c.l.b16 %v81
  %v162 = vunpack.c.l.b16 %v82
  %v163 = vpack.c.b16 %v148, %v147
  %v164 = vpack.c.b16 %v150, %v149
  %v165 = vpack.c.b16 %v152, %v151
  %v166 = vpack.c.b16 %v154, %v153
  %v167 = vpack.c.b16 %v156, %v155
  %v168 = vpack.c.b16 %v158, %v157
  %v169 = vpack.c.b16 %v160, %v159
  %v170 = vpack.c.b16 %v162, %v161
  %179 = vmatprep.subr.bf16.mxu0 0
  %180 = vmatpush1.bf16.msra.mxu0 %v163
  %181 = vmatprep.subr.bf16.mxu0 0
  %182 = vmatpush1.bf16.msra.mxu0 %v164
  %183 = vmatprep.subr.bf16.mxu0 0
  %184 = vmatpush1.bf16.msra.mxu0 %v165
  %185 = vmatprep.subr.bf16.mxu0 0
  %186 = vmatpush1.bf16.msra.mxu0 %v166
  %187 = vmatprep.subr.bf16.mxu0 0
  %188 = vmatpush1.bf16.msra.mxu0 %v167
  %189 = vmatprep.subr.bf16.mxu0 0
  %190 = vmatpush1.bf16.msra.mxu0 %v168
  %191 = vmatprep.subr.bf16.mxu0 0
  %192 = vmatpush1.bf16.msra.mxu0 %v169
  %193 = vmatprep.subr.bf16.mxu0 0
  %194 = vmatpush1.bf16.msra.mxu0 %v170
  %195 = vmatprep.subr.bf16.mxu0 0
  %196 = vmatpush1.bf16.msra.mxu0 0
  %197 = vmatprep.subr.bf16.mxu0 0
  %198 = vmatpush1.bf16.msra.mxu0 0
  %199 = vmatprep.subr.bf16.mxu0 0
  %200 = vmatpush1.bf16.msra.mxu0 0
  %201 = vmatprep.subr.bf16.mxu0 0
  %202 = vmatpush1.bf16.msra.mxu0 0
  %203 = vmatprep.subr.bf16.mxu0 0
  %204 = vmatpush1.bf16.msra.mxu0 0
  %205 = vmatprep.subr.bf16.mxu0 0
  %206 = vmatpush1.bf16.msra.mxu0 0
  %207 = vmatprep.subr.bf16.mxu0 0
  %208 = vmatpush1.bf16.msra.mxu0 0
  %209 = vmatprep.subr.bf16.mxu0 0
  %210 = vmatpush1.bf16.msra.mxu0 0
  %211 = vmatprep.mubr.bf16.mxu0 0
  %212 = vmatmul.mubr.bf16.gmra.mrb[0].mxu0 %v115
  %v213 = vpop.f32.mrb[0].mxu0
  %v214 = vadd.f32 0.0, %v213
  %v215 = vpop.f32.mrb[0].mxu0
  %v216 = vpop.f32.mrb[0].mxu0
  %v217 = vadd.f32 0.0, %v216
  %v218 = vpop.f32.mrb[0].mxu0
  %219 = vmatprep.mubr.bf16.mxu0 0
  %220 = vmatmul.mubr.bf16.gmra.mrb[0].mxu0 %v116
  %v221 = vpop.f32.mrb[0].mxu0
  %v222 = vadd.f32 0.0, %v221
  %v223 = vpop.f32.mrb[0].mxu0
  %v224 = vpop.f32.mrb[0].mxu0
  %v225 = vadd.f32 0.0, %v224
  %v226 = vpop.f32.mrb[0].mxu0
  %227 = vmatprep.mubr.bf16.mxu0 0
  %228 = vmatmul.mubr.bf16.gmra.mrb[0].mxu0 %v117
  %v229 = vpop.f32.mrb[0].mxu0
  %v230 = vadd.f32 0.0, %v229
  %v231 = vpop.f32.mrb[0].mxu0
  %v232 = vpop.f32.mrb[0].mxu0
  %v233 = vadd.f32 0.0, %v232
  %v234 = vpop.f32.mrb[0].mxu0
  %235 = vmatprep.mubr.bf16.mxu0 0
  %236 = vmatmul.mubr.bf16.gmra.mrb[0].mxu0 %v118
  %v237 = vpop.f32.mrb[0].mxu0
  %v238 = vadd.f32 0.0, %v237
  %v239 = vpop.f32.mrb[0].mxu0
  %v240 = vpop.f32.mrb[0].mxu0
  %v241 = vadd.f32 0.0, %v240
  %v242 = vpop.f32.mrb[0].mxu0
  %243 = vmatprep.mubr.bf16.mxu0 0
  %244 = vmatmul.mubr.bf16.gmra.mrb[0].mxu0 %v119
  %v245 = vpop.f32.mrb[0].mxu0
  %v246 = vadd.f32 0.0, %v245
  %v247 = vpop.f32.mrb[0].mxu0
  %v248 = vpop.f32.mrb[0].mxu0
  %v249 = vadd.f32 0.0, %v248
  %v250 = vpop.f32.mrb[0].mxu0
  %251 = vmatprep.mubr.bf16.mxu0 0
  %252 = vmatmul.mubr.bf16.gmra.mrb[0].mxu0 %v120
  %v253 = vpop.f32.mrb[0].mxu0
  %v254 = vadd.f32 0.0, %v253
  %v255 = vpop.f32.mrb[0].mxu0
  %v256 = vpop.f32.mrb[0].mxu0
  %v257 = vadd.f32 0.0, %v256
  %v258 = vpop.f32.mrb[0].mxu0
  %259 = vmatprep.mubr.bf16.mxu0 0
  %260 = vmatmul.mubr.bf16.gmra.mrb[0].mxu0 %v121
  %v261 = vpop.f32.mrb[0].mxu0
  %v262 = vadd.f32 0.0, %v261
  %v263 = vpop.f32.mrb[0].mxu0
  %v264 = vpop.f32.mrb[0].mxu0
  %v265 = vadd.f32 0.0, %v264
  %v266 = vpop.f32.mrb[0].mxu0
  %267 = vmatprep.mubr.bf16.mxu0 0
  %268 = vmatmul.mubr.bf16.gmra.mrb[0].mxu0 %v122
  %v269 = vpop.f32.mrb[0].mxu0
  %v270 = vadd.f32 0.0, %v269
  %v271 = vpop.f32.mrb[0].mxu0
  %v272 = vpop.f32.mrb[0].mxu0
  %v273 = vadd.f32 0.0, %v272
  %v274 = vpop.f32.mrb[0].mxu0
  %275 = vdwg.mxu0
  %v276 = vadd.f32 %v35, %v214
  %v277 = vadd.f32 %v36, %v217
  %v278 = vadd.f32 %v37, %v222
  %v279 = vadd.f32 %v38, %v225
  %v280 = vadd.f32 %v39, %v230
  %v281 = vadd.f32 %v40, %v233
  %v282 = vadd.f32 %v41, %v238
  %v283 = vadd.f32 %v42, %v241
  %v284 = vadd.f32 %v43, %v246
  %v285 = vadd.f32 %v44, %v249
  %v286 = vadd.f32 %v45, %v254
  %v287 = vadd.f32 %v46, %v257
  %v288 = vadd.f32 %v47, %v262
  %v289 = vadd.f32 %v48, %v265
  %v290 = vadd.f32 %v49, %v270
  %v291 = vadd.f32 %v50, %v273
  %292 = vst [vmem:[#allocation2] sm:$0xff] %v276
  %293 = vst [vmem:[#allocation2 + $0x8] sm:$0xff] %v277
  %294 = vst [vmem:[#allocation2 + $0x10] sm:$0xff] %v278
  %295 = vst [vmem:[#allocation2 + $0x18] sm:$0xff] %v279
  %296 = vst [vmem:[#allocation2 + $0x20] sm:$0xff] %v280
  %297 = vst [vmem:[#allocation2 + $0x28] sm:$0xff] %v281
  %298 = vst [vmem:[#allocation2 + $0x30] sm:$0xff] %v282
  %299 = vst [vmem:[#allocation2 + $0x38] sm:$0xff] %v283
  %300 = vst [vmem:[#allocation2 + $0x40] sm:$0xff] %v284
  %301 = vst [vmem:[#allocation2 + $0x48] sm:$0xff] %v285
  %302 = vst [vmem:[#allocation2 + $0x50] sm:$0xff] %v286
  %303 = vst [vmem:[#allocation2 + $0x58] sm:$0xff] %v287
  %304 = vst [vmem:[#allocation2 + $0x60] sm:$0xff] %v288
  %305 = vst [vmem:[#allocation2 + $0x68] sm:$0xff] %v289
  %306 = vst [vmem:[#allocation2 + $0x70] sm:$0xff] %v290
  %307 = vst [vmem:[#allocation2 + $0x78] sm:$0xff] %v291
  // Predicated region
  $region14: #{encoder_block.2} parent=0 // pred_check
    %p308 = pneg %p15
  $region15: #{encoder_block.2} parent=0 // pred_check_branch
    %310 = sbr.rel (%p308) target = $region17
  $region16: #{encoder_block.2} parent=0 // pred_region
    %v311 = vld [vmem:[#allocation2] sm:$0xff]
    %v312 = vld [vmem:[#allocation2 + $0x8] sm:$0xff]
    %v313 = vld [vmem:[#allocation2 + $0x10] sm:$0xff]
    %v314 = vld [vmem:[#allocation2 + $0x18] sm:$0xff]
    %v315 = vld [vmem:[#allocation2 + $0x20] sm:$0xff]
    %v316 = vld [vmem:[#allocation2 + $0x28] sm:$0xff]
    %v317 = vld [vmem:[#allocation2 + $0x30] sm:$0xff]
    %v318 = vld [vmem:[#allocation2 + $0x38] sm:$0xff]
    %v319 = vld [vmem:[#allocation2 + $0x40] sm:$0xff]
    %v320 = vld [vmem:[#allocation2 + $0x48] sm:$0xff]
    %v321 = vld [vmem:[#allocation2 + $0x50] sm:$0xff]
    %v322 = vld [vmem:[#allocation2 + $0x58] sm:$0xff]
    %v323 = vld [vmem:[#allocation2 + $0x60] sm:$0xff]
    %v324 = vld [vmem:[#allocation2 + $0x68] sm:$0xff]
    %v325 = vld [vmem:[#allocation2 + $0x70] sm:$0xff]
    %v326 = vld [vmem:[#allocation2 + $0x78] sm:$0xff]
    %v327 = vpack.c.bf16 %v312, %v311
    %v328 = vpack.c.bf16 %v314, %v313
    %v329 = vpack.c.bf16 %v316, %v315
    %v330 = vpack.c.bf16 %v318, %v317
    %v331 = vpack.c.bf16 %v320, %v319
    %v332 = vpack.c.bf16 %v322, %v321
    %v333 = vpack.c.bf16 %v324, %v323
    %v334 = vpack.c.bf16 %v326, %v325
    %v343 = vunpack.c.l.b16 %v327
    %v344 = vunpack.c.h.b16 %v327
    %v345 = vunpack.c.l.b16 %v328
    %v346 = vunpack.c.h.b16 %v328
    %v347 = vunpack.c.l.b16 %v329
    %v348 = vunpack.c.h.b16 %v329
    %v349 = vunpack.c.l.b16 %v330
    %v350 = vunpack.c.h.b16 %v330
    %v351 = vunpack.c.l.b16 %v331
    %v352 = vunpack.c.h.b16 %v331
    %v353 = vunpack.c.l.b16 %v332
    %v354 = vunpack.c.h.b16 %v332
    %v355 = vunpack.c.l.b16 %v333
    %v356 = vunpack.c.h.b16 %v333
    %v357 = vunpack.c.l.b16 %v334
    %v358 = vunpack.c.h.b16 %v334
    %v359 = vpack.c.b16 %v343, %v343
    %v360 = vpack.c.b16 %v344, %v344
    %v361 = vpack.c.b16 %v345, %v345
    %v362 = vpack.c.b16 %v346, %v346
    %v363 = vpack.c.b16 %v347, %v347
    %v364 = vpack.c.b16 %v348, %v348
    %v365 = vpack.c.b16 %v349, %v349
    %v366 = vpack.c.b16 %v350, %v350
    %v367 = vpack.c.b16 %v351, %v351
    %v368 = vpack.c.b16 %v352, %v352
    %v369 = vpack.c.b16 %v353, %v353
    %v370 = vpack.c.b16 %v354, %v354
    %v371 = vpack.c.b16 %v355, %v355
    %v372 = vpack.c.b16 %v356, %v356
    %v373 = vpack.c.b16 %v357, %v357
    %v374 = vpack.c.b16 %v358, %v358
    %391 = vst [vmem:[%s2] sm:$0xf] %v359
    %392 = vst [vmem:[%s2 + $0x4] sm:$0xf] %v360
    %393 = vst [vmem:[%s2 + $0x8] sm:$0xf] %v361
    %394 = vst [vmem:[%s2 + $0xc] sm:$0xf] %v362
    %395 = vst [vmem:[%s2 + $0x10] sm:$0xf] %v363
    %396 = vst [vmem:[%s2 + $0x14] sm:$0xf] %v364
    %397 = vst [vmem:[%s2 + $0x18] sm:$0xf] %v365
    %398 = vst [vmem:[%s2 + $0x1c] sm:$0xf] %v366
    %399 = vst [vmem:[%s2 + $0x20] sm:$0xf] %v367
    %400 = vst [vmem:[%s2 + $0x24] sm:$0xf] %v368
    %401 = vst [vmem:[%s2 + $0x28] sm:$0xf] %v369
    %402 = vst [vmem:[%s2 + $0x2c] sm:$0xf] %v370
    %403 = vst [vmem:[%s2 + $0x30] sm:$0xf] %v371
    %404 = vst [vmem:[%s2 + $0x34] sm:$0xf] %v372
    %405 = vst [vmem:[%s2 + $0x38] sm:$0xf] %v373
    %406 = vst [vmem:[%s2 + $0x3c] sm:$0xf] %v374
    %v407 = vadd.f32 %v311, %v312
    %v408 = vadd.f32 %v407, %v313
    %v409 = vadd.f32 %v408, %v314
    %v410 = vadd.f32 %v409, %v315
    %v411 = vadd.f32 %v410, %v316
    %v412 = vadd.f32 %v411, %v317
    %v413 = vadd.f32 %v412, %v318
    %v414 = vadd.f32 %v413, %v319
    %v415 = vadd.f32 %v414, %v320
    %v416 = vadd.f32 %v415, %v321
    %v417 = vadd.f32 %v416, %v322
    %v418 = vadd.f32 %v417, %v323
    %v419 = vadd.f32 %v418, %v324
    %v420 = vadd.f32 %v419, %v325
    %v421 = vadd.f32 %v420, %v326
    %422 = vst [vmem:[%s3] sm:$0xff] %v421
    %v423 = vmul.f32 %v311, %v311
    %v424 = vmul.f32 %v312, %v312
    %v425 = vmul.f32 %v313, %v313
    %v426 = vmul.f32 %v314, %v314
    %v427 = vmul.f32 %v315, %v315
    %v428 = vmul.f32 %v316, %v316
    %v429 = vmul.f32 %v317, %v317
    %v430 = vmul.f32 %v318, %v318
    %v431 = vmul.f32 %v319, %v319
    %v432 = vmul.f32 %v320, %v320
    %v433 = vmul.f32 %v321, %v321
    %v434 = vmul.f32 %v322, %v322
    %v435 = vmul.f32 %v323, %v323
    %v436 = vmul.f32 %v324, %v324
    %v437 = vmul.f32 %v325, %v325
    %v438 = vmul.f32 %v326, %v326
    %v439 = vadd.f32 %v423, %v424
    %v440 = vadd.f32 %v439, %v425
    %v441 = vadd.f32 %v440, %v426
    %v442 = vadd.f32 %v441, %v427
    %v443 = vadd.f32 %v442, %v428
    %v444 = vadd.f32 %v443, %v429
    %v445 = vadd.f32 %v444, %v430
    %v446 = vadd.f32 %v445, %v431
    %v447 = vadd.f32 %v446, %v432
    %v448 = vadd.f32 %v447, %v433
    %v449 = vadd.f32 %v448, %v434
    %v450 = vadd.f32 %v449, %v435
    %v451 = vadd.f32 %v450, %v436
    %v452 = vadd.f32 %v451, %v437
    %v453 = vadd.f32 %v452, %v438
    %454 = vst [vmem:[%s4] sm:$0xff] %v453
  $region17: #{encoder_block.2} parent=0 // pred_fallthru
    _
  // Predicated region
  $region18: #{encoder_block.2} parent=0 // pred_check
    _
  $region19: #{encoder_block.2} parent=0 // pred_check_branch
    %456 = sbr.rel (0) target = $region21
  $region20: #{encoder_block.2} parent=0 // pred_region
    _
  $region21: #{encoder_block.2} parent=0 // pred_fallthru
    _
  // Predicated region
  $region22: #{encoder_block.2} parent=0 // pred_check
    _
  $region23: #{encoder_block.2} parent=0 // pred_check_branch
    %458 = sbr.rel (0) target = $region25
  $region24: #{encoder_block.2} parent=0 // pred_region
    _
  $region25: #{encoder_block.2} parent=0 // pred_fallthru
    _
  // Predicated region
  $region26: #{encoder_block.2} parent=0 // pred_check
    _
  $region27: #{encoder_block.2} parent=0 // pred_check_branch
    %460 = sbr.rel (0) target = $region29
  $region28: #{encoder_block.2} parent=0 // pred_region
    _
  $region29: #{encoder_block.2} parent=0 // pred_fallthru
    _
  // Predicated region
  $region30: #{encoder_block.2} parent=0 // pred_check
    _
  $region31: #{encoder_block.2} parent=0 // pred_check_branch
    %462 = sbr.rel (0) target = $region33
  $region32: #{encoder_block.2} parent=0 // pred_region
    _
  $region33: #{encoder_block.2} parent=0 // pred_fallthru
    _
  // Predicated region
  $region34: #{encoder_block.2} parent=0 // pred_check
    _
  $region35: #{encoder_block.2} parent=0 // pred_check_branch
    %464 = sbr.rel (0) target = $region37
  $region36: #{encoder_block.2} parent=0 // pred_region
    _
  $region37: #{encoder_block.2} parent=0 // pred_fallthru
    _
  // Predicated region
  $region38: #{encoder_block.2} parent=0 // pred_check
    _
  $region39: #{encoder_block.2} parent=0 // pred_check_branch
    %466 = sbr.rel (0) target = $region41
  $region40: #{encoder_block.2} parent=0 // pred_region
    _
  $region41: #{encoder_block.2} parent=0 // pred_fallthru
    _

</llo_original>
